<compile_context>
chip_gen: v5e
topology: v5e:2x2
jax: 0.10.0
libtpu: 0.0.40
codegen_flags: <defaults>
</compile_context>

<pallas_src>
import math

import numpy as np
import jax
import jax.numpy as jnp
from jax import lax
from jax.experimental import pallas as pl
from jax.experimental.pallas import tpu as pltpu

# ----------------------------- sizes & lane layout ---------------------------
N_BATCH = 2
L_IN = 16
UP_SIZE = 20
BN_EPS = 1e-5
L1, L2, L3 = 15, 14, 13          # lengths after conv1/conv2/conv3 (k=4, s=1, p=1)

LANES = 128                      # everything lives in one 128-lane row
SEG = 32                         # per-sample lane segment
OFF = 4                          # left guard columns (always zero)
UP_ROW = 104                     # packed-buffer row where the upsample matrix starts
PACK_ROWS = UP_ROW + LANES       # 232


# ----------------------------------- kernel ---------------------------------

def picnn_kernel(x_ref, p_ref, o_ref):
    # ---- static slices of the single packed parameter buffer ---------------
    w1c = p_ref[0:4, 0:4]                  # conv1 weight  [c_out, k]   (C_in = 1)
    w2f = p_ref[8:16, 0:16]                # conv2 weight  [c_out, k*C_in]
    w3f = p_ref[16:32, 0:32]               # conv3 weight  [c_out, k*C_in]
    w4f = p_ref[32:33, 0:48]               # conv4 weight  [c_out, k*C_in]
    b4 = p_ref[33:34, 0:1]                 # conv4 bias
    gb1 = p_ref[40:48, 0:1]                # [gamma1 (4); beta1 (4)]
    gb2 = p_ref[48:64, 0:1]                # [gamma2 (8); beta2 (8)]
    gb3 = p_ref[64:96, 0:1]                # [gamma3 (16); beta3 (16)]
    masks = p_ref[96:99, :]                # valid-column masks, rows: L1 / L2 / L3
    up = p_ref[UP_ROW:UP_ROW + LANES, :]   # (128,128) 0/1 nearest-upsample selection

    g1, be1 = gb1[0:4], gb1[4:8]
    g2, be2 = gb2[0:8], gb2[8:16]
    g3, be3 = gb3[0:16], gb3[16:32]
    m1, m2, m3 = masks[0:1, :], masks[1:2, :], masks[2:3, :]

    def widen(a):
        # aw[:, c] = a[:, c-1] with zero guards; conv window k is aw[:, k:k+128]
        c = a.shape[0]
        return jnp.concatenate(
            [jnp.zeros((c, 1), jnp.float32), a, jnp.zeros((c, 3), jnp.float32)],
            axis=1)

    def im2col(a, k_taps):
        # (C, 128) -> (k_taps*C, 128): shifted windows stacked on sublanes,
        # row order = tap-major, input-channel-minor (matches weight packing).
        aw = widen(a)
        return jnp.concatenate([aw[:, k:k + LANES] for k in range(k_taps)], axis=0)

    def bn_relu(y, gamma, beta, mask, count):
        # training-mode BatchNorm1d over batch+length, biased variance.
        # Single pass: E[x] and E[x^2] are independent lane reductions (XLU);
        # var = E[x^2] - E[x]^2.  Invalid lanes are masked out of the stats
        # and re-zeroed on the way out so they never pollute the next conv.
        inv = 1.0 / count
        ym = y * mask
        mean = jnp.sum(ym, axis=1, keepdims=True) * inv
        ex2 = jnp.sum(ym * ym, axis=1, keepdims=True) * inv
        var = ex2 - mean * mean
        scale = lax.rsqrt(var + BN_EPS) * gamma
        shift = beta - mean * scale
        return jnp.maximum(y * scale + shift, 0.0) * mask

    # conv1: 1 -> 4, k=4, p=1  (bias cancels in BN).  VPU broadcast-FMAs.
    aw = widen(x_ref[...])                               # (1, 132)
    y = w1c[:, 0:1] * aw[:, 0:LANES]
    for k in range(1, 4):
        y = y + w1c[:, k:k + 1] * aw[:, k:k + LANES]     # (4, 128)
    a = bn_relu(y, g1, be1, m1, float(N_BATCH * L1))

    # conv2: 4 -> 8  (im2col + ONE matmul for both samples)
    y = jnp.dot(w2f, im2col(a, 4), preferred_element_type=jnp.float32)
    a = bn_relu(y, g2, be2, m2, float(N_BATCH * L2))

    # conv3: 8 -> 16
    y = jnp.dot(w3f, im2col(a, 4), preferred_element_type=jnp.float32)
    a = bn_relu(y, g3, be3, m3, float(N_BATCH * L3))

    # nearest upsample 13 -> 20 (per-sample block-diagonal 0/1 selection matmul)
    a = jnp.dot(a, up, preferred_element_type=jnp.float32)

    # conv4: 16 -> 1, k=3, p=1, with bias (no BN / ReLU)
    y = jnp.dot(w4f, im2col(a, 3), preferred_element_type=jnp.float32) + b4
    o_ref[...] = y.astype(o_ref.dtype)


# ----------------------------------- wrapper --------------------------------

@jax.jit
def picnn_forward(x, packed):
    # Layout plumbing only: place sample n's data at lanes OFF + n*SEG + i.
    xs = jnp.pad(x[:, 0, :], ((0, 0), (0, SEG - L_IN)))                # (N, SEG)
    x_lay = jnp.pad(xs.reshape(1, N_BATCH * SEG),
                    ((0, 0), (OFF, LANES - OFF - N_BATCH * SEG)))      # (1, 128)
    vmem = pl.BlockSpec(memory_space=pltpu.MemorySpace.VMEM)
    slab = pl.pallas_call(
        picnn_kernel,
        out_shape=jax.ShapeDtypeStruct((1, LANES), jnp.float32),
        in_specs=[vmem, vmem],
        out_specs=vmem,
    )(x_lay, packed)
    seg = slab[0, OFF:OFF + N_BATCH * SEG].reshape(N_BATCH, SEG)
    return seg[:, :UP_SIZE][:, None, :]                                # (N, 1, 20)


# ----------------------------- parameter packing ----------------------------

def pack_params(params):
    """Pack all weights, BN params, masks and the upsample matrix into ONE
    (PACK_ROWS, 128) f32 buffer (a single HBM->VMEM DMA)."""
    (w1, b1, g1, be1, w2, b2, g2, be2, w3, b3, g3, be3, w4, b4) = (
        np.asarray(p, np.float32) for p in params)
    del b1, b2, b3  # pre-BN biases cancel exactly against the batch-mean subtraction

    P = np.zeros((PACK_ROWS, LANES), np.float32)
    # conv weights, im2col-flattened: W[c_out, k*C_in + c_in] = w[c_out, c_in, k]
    P[0:4, 0:4] = w1[:, 0, :]
    P[8:16, 0:16] = w2.transpose(0, 2, 1).reshape(8, 16)
    P[16:32, 0:32] = w3.transpose(0, 2, 1).reshape(16, 32)
    P[32, 0:48] = w4.transpose(0, 2, 1).reshape(48)
    P[33, 0] = b4[0, 0]
    # BN gamma / beta as contiguous (C, 1) column blocks (one slab load per layer)
    P[40:44, 0] = g1[:, 0]
    P[44:48, 0] = be1[:, 0]
    P[48:56, 0] = g2[:, 0]
    P[56:64, 0] = be2[:, 0]
    P[64:80, 0] = g3[:, 0]
    P[80:96, 0] = be3[:, 0]
    # per-layer valid-column masks (both samples), contiguous rows 96..98
    for row, length in ((96, L1), (97, L2), (98, L3)):
        for n in range(N_BATCH):
            base = OFF + n * SEG
            P[row, base:base + length] = 1.0
    # nearest upsample 13 -> 20 as a per-sample block-diagonal 0/1 matrix
    for n in range(N_BATCH):
        base = OFF + n * SEG
        for i in range(UP_SIZE):
            src = min(int(math.floor(i * L3 / UP_SIZE)), L3 - 1)
            P[UP_ROW + base + src, base + i] = 1.0
    return jnp.asarray(P)


# ------------------------------ params / reference --------------------------

def init_params(key):
    def conv_init(k, c_out, c_in, ksz):
        kw, kb = jax.random.split(k)
        bound = 1.0 / math.sqrt(c_in * ksz)
        w = jax.random.uniform(kw, (c_out, c_in, ksz), jnp.float32, -bound, bound)
        b = jax.random.uniform(kb, (c_out, 1), jnp.float32, -bound, bound)
        return w, b

    k1, k2, k3, k4 = jax.random.split(key, 4)
    w1, b1 = conv_init(k1, 4, 1, 4)
    w2, b2 = conv_init(k2, 8, 4, 4)
    w3, b3 = conv_init(k3, 16, 8, 4)
    w4, b4 = conv_init(k4, 1, 16, 3)
    g1, be1 = jnp.ones((4, 1), jnp.float32), jnp.zeros((4, 1), jnp.float32)
    g2, be2 = jnp.ones((8, 1), jnp.float32), jnp.zeros((8, 1), jnp.float32)
    g3, be3 = jnp.ones((16, 1), jnp.float32), jnp.zeros((16, 1), jnp.float32)
    return (w1, b1, g1, be1, w2, b2, g2, be2, w3, b3, g3, be3, w4, b4)


def nearest_upsample_matrix(in_size, out_size):
    # PyTorch nn.Upsample(mode='nearest'): src = floor(dst * in / out)
    s = np.zeros((in_size, out_size), np.float32)
    for i in range(out_size):
        src = min(int(math.floor(i * in_size / out_size)), in_size - 1)
        s[src, i] = 1.0
    return jnp.asarray(s)


def ref_forward(x, params, up):
    """Pure-JAX reference (XLA conv + explicit training-mode BN)."""
    (w1, b1, g1, be1, w2, b2, g2, be2, w3, b3, g3, be3, w4, b4) = params

    def conv(xx, w, b, pad):
        out = lax.conv_general_dilated(
            xx, w, window_strides=(1,), padding=[(pad, pad)],
            dimension_numbers=("NCH", "OIH", "NCH"))
        return out + b.reshape(1, -1, 1)

    def bn_relu(xx, g, be):
        mean = xx.mean(axis=(0, 2), keepdims=True)
        var = ((xx - mean) ** 2).mean(axis=(0, 2), keepdims=True)
        y = (xx - mean) * lax.rsqrt(var + BN_EPS)
        y = y * g.reshape(1, -1, 1) + be.reshape(1, -1, 1)
        return jnp.maximum(y, 0.0)

    out = bn_relu(conv(x, w1, b1, 1), g1, be1)
    out = bn_relu(conv(out, w2, b2, 1), g2, be2)
    out = bn_relu(conv(out, w3, b3, 1), g3, be3)
    out = jnp.einsum("ncl,lo->nco", out, up)
    return conv(out, w4, b4, 1)


# ----------------------------------- main ------------------------------------

if __name__ == "__main__":
    key = jax.random.PRNGKey(0)
    kx, kp = jax.random.split(key)
    x = jax.random.normal(kx, (N_BATCH, 1, L_IN), jnp.float32)
    params = init_params(kp)
    packed = pack_params(params)

    out = jax.block_until_ready(picnn_forward(x, packed))
    assert out.shape == (N_BATCH, 1, UP_SIZE)

    ref = jax.block_until_ready(
        ref_forward(x, params, nearest_upsample_matrix(L3, UP_SIZE)))
    assert jnp.allclose(out, ref, atol=1e-4, rtol=1e-4), float(
        jnp.max(jnp.abs(out - ref)))

    print("KERNEL_OK")
</pallas_src>

<mosaic_0001>
module attributes {stable_mosaic.version = 11 : i64} {
  func.func @picnn_kernel(%arg0: memref<1x128xf32, #tpu.memory_space<vmem>>, %arg1: memref<232x128xf32, #tpu.memory_space<vmem>>, %arg2: memref<1x128xf32, #tpu.memory_space<vmem>>) attributes {dimension_semantics = [], scalar_prefetch = 0 : i64, scratch_operands = 0 : i64, tpu.core_type = #tpu.core_type<tc>} {
    %c0 = arith.constant 0 : index
    %c0_0 = arith.constant 0 : index
    %0 = vector.load %arg1[%c0, %c0_0] : memref<232x128xf32, #tpu.memory_space<vmem>>, vector<4x4xf32>
    %c8 = arith.constant 8 : index
    %c0_1 = arith.constant 0 : index
    %1 = vector.load %arg1[%c8, %c0_1] : memref<232x128xf32, #tpu.memory_space<vmem>>, vector<8x16xf32>
    %c16 = arith.constant 16 : index
    %c0_2 = arith.constant 0 : index
    %2 = vector.load %arg1[%c16, %c0_2] : memref<232x128xf32, #tpu.memory_space<vmem>>, vector<16x32xf32>
    %c32 = arith.constant 32 : index
    %c0_3 = arith.constant 0 : index
    %3 = vector.load %arg1[%c32, %c0_3] : memref<232x128xf32, #tpu.memory_space<vmem>>, vector<1x48xf32>
    %c33 = arith.constant 33 : index
    %c0_4 = arith.constant 0 : index
    %4 = vector.load %arg1[%c33, %c0_4] : memref<232x128xf32, #tpu.memory_space<vmem>>, vector<1x1xf32>
    %c40 = arith.constant 40 : index
    %c0_5 = arith.constant 0 : index
    %5 = vector.load %arg1[%c40, %c0_5] : memref<232x128xf32, #tpu.memory_space<vmem>>, vector<8x1xf32>
    %c48 = arith.constant 48 : index
    %c0_6 = arith.constant 0 : index
    %6 = vector.load %arg1[%c48, %c0_6] : memref<232x128xf32, #tpu.memory_space<vmem>>, vector<16x1xf32>
    %c64 = arith.constant 64 : index
    %c0_7 = arith.constant 0 : index
    %7 = vector.load %arg1[%c64, %c0_7] : memref<232x128xf32, #tpu.memory_space<vmem>>, vector<32x1xf32>
    %c96 = arith.constant 96 : index
    %c0_8 = arith.constant 0 : index
    %8 = vector.load %arg1[%c96, %c0_8] : memref<232x128xf32, #tpu.memory_space<vmem>>, vector<3x128xf32>
    %c104 = arith.constant 104 : index
    %c0_9 = arith.constant 0 : index
    %9 = vector.load %arg1[%c104, %c0_9] : memref<232x128xf32, #tpu.memory_space<vmem>>, vector<128x128xf32>
    %10 = vector.extract_strided_slice %5 {offsets = [0, 0], sizes = [4, 1], strides = [1, 1]} : vector<8x1xf32> to vector<4x1xf32>
    %11 = vector.extract_strided_slice %5 {offsets = [4, 0], sizes = [4, 1], strides = [1, 1]} : vector<8x1xf32> to vector<4x1xf32>
    %12 = vector.extract_strided_slice %6 {offsets = [0, 0], sizes = [8, 1], strides = [1, 1]} : vector<16x1xf32> to vector<8x1xf32>
    %13 = vector.extract_strided_slice %6 {offsets = [8, 0], sizes = [8, 1], strides = [1, 1]} : vector<16x1xf32> to vector<8x1xf32>
    %14 = vector.extract_strided_slice %7 {offsets = [0, 0], sizes = [16, 1], strides = [1, 1]} : vector<32x1xf32> to vector<16x1xf32>
    %15 = vector.extract_strided_slice %7 {offsets = [16, 0], sizes = [16, 1], strides = [1, 1]} : vector<32x1xf32> to vector<16x1xf32>
    %16 = vector.extract_strided_slice %8 {offsets = [0, 0], sizes = [1, 128], strides = [1, 1]} : vector<3x128xf32> to vector<1x128xf32>
    %17 = vector.extract_strided_slice %8 {offsets = [1, 0], sizes = [1, 128], strides = [1, 1]} : vector<3x128xf32> to vector<1x128xf32>
    %18 = vector.extract_strided_slice %8 {offsets = [2, 0], sizes = [1, 128], strides = [1, 1]} : vector<3x128xf32> to vector<1x128xf32>
    %c0_10 = arith.constant 0 : index
    %c0_11 = arith.constant 0 : index
    %19 = vector.load %arg0[%c0_10, %c0_11] : memref<1x128xf32, #tpu.memory_space<vmem>>, vector<1x128xf32>
    %cst = arith.constant 0.000000e+00 : f32
    %20 = vector.broadcast %cst : f32 to vector<1x1xf32>
    %cst_12 = arith.constant 0.000000e+00 : f32
    %21 = vector.broadcast %cst_12 : f32 to vector<1x3xf32>
    %22 = tpu.concatenate %20, %19, %21 in 1 : vector<1x1xf32>, vector<1x128xf32>, vector<1x3xf32> -> vector<1x132xf32>
    %23 = vector.extract_strided_slice %0 {offsets = [0, 0], sizes = [4, 1], strides = [1, 1]} : vector<4x4xf32> to vector<4x1xf32>
    %24 = vector.extract_strided_slice %22 {offsets = [0, 0], sizes = [1, 128], strides = [1, 1]} : vector<1x132xf32> to vector<1x128xf32>
    %25 = vector.broadcast %23 : vector<4x1xf32> to vector<4x128xf32>
    %26 = vector.broadcast %24 : vector<1x128xf32> to vector<4x128xf32>
    %27 = arith.mulf %25, %26 : vector<4x128xf32>
    %28 = vector.extract_strided_slice %0 {offsets = [0, 1], sizes = [4, 1], strides = [1, 1]} : vector<4x4xf32> to vector<4x1xf32>
    %29 = vector.extract_strided_slice %22 {offsets = [0, 1], sizes = [1, 128], strides = [1, 1]} : vector<1x132xf32> to vector<1x128xf32>
    %30 = vector.broadcast %28 : vector<4x1xf32> to vector<4x128xf32>
    %31 = vector.broadcast %29 : vector<1x128xf32> to vector<4x128xf32>
    %32 = arith.mulf %30, %31 : vector<4x128xf32>
    %33 = arith.addf %27, %32 : vector<4x128xf32>
    %34 = vector.extract_strided_slice %0 {offsets = [0, 2], sizes = [4, 1], strides = [1, 1]} : vector<4x4xf32> to vector<4x1xf32>
    %35 = vector.extract_strided_slice %22 {offsets = [0, 2], sizes = [1, 128], strides = [1, 1]} : vector<1x132xf32> to vector<1x128xf32>
    %36 = vector.broadcast %34 : vector<4x1xf32> to vector<4x128xf32>
    %37 = vector.broadcast %35 : vector<1x128xf32> to vector<4x128xf32>
    %38 = arith.mulf %36, %37 : vector<4x128xf32>
    %39 = arith.addf %33, %38 : vector<4x128xf32>
    %40 = vector.extract_strided_slice %0 {offsets = [0, 3], sizes = [4, 1], strides = [1, 1]} : vector<4x4xf32> to vector<4x1xf32>
    %41 = vector.extract_strided_slice %22 {offsets = [0, 3], sizes = [1, 128], strides = [1, 1]} : vector<1x132xf32> to vector<1x128xf32>
    %42 = vector.broadcast %40 : vector<4x1xf32> to vector<4x128xf32>
    %43 = vector.broadcast %41 : vector<1x128xf32> to vector<4x128xf32>
    %44 = arith.mulf %42, %43 : vector<4x128xf32>
    %45 = arith.addf %39, %44 : vector<4x128xf32>
    %46 = vector.broadcast %16 : vector<1x128xf32> to vector<4x128xf32>
    %47 = arith.mulf %45, %46 : vector<4x128xf32>
    %cst_13 = arith.constant dense<0.000000e+00> : vector<4xf32>
    %48 = vector.multi_reduction <add>, %47, %cst_13 [1] : vector<4x128xf32> to vector<4xf32>
    %49 = vector.shape_cast %48 : vector<4xf32> to vector<4x1xf32>
    %cst_14 = arith.constant 0.0333333351 : f32
    %50 = vector.broadcast %cst_14 : f32 to vector<4x1xf32>
    %51 = arith.mulf %49, %50 : vector<4x1xf32>
    %52 = arith.mulf %47, %47 : vector<4x128xf32>
    %cst_15 = arith.constant dense<0.000000e+00> : vector<4xf32>
    %53 = vector.multi_reduction <add>, %52, %cst_15 [1] : vector<4x128xf32> to vector<4xf32>
    %54 = vector.shape_cast %53 : vector<4xf32> to vector<4x1xf32>
    %cst_16 = arith.constant 0.0333333351 : f32
    %55 = vector.broadcast %cst_16 : f32 to vector<4x1xf32>
    %56 = arith.mulf %54, %55 : vector<4x1xf32>
    %57 = arith.mulf %51, %51 : vector<4x1xf32>
    %58 = arith.subf %56, %57 : vector<4x1xf32>
    %cst_17 = arith.constant 9.99999974E-6 : f32
    %59 = vector.broadcast %cst_17 : f32 to vector<4x1xf32>
    %60 = arith.addf %58, %59 : vector<4x1xf32>
    %61 = math.rsqrt %60 : vector<4x1xf32>
    %62 = arith.mulf %61, %10 : vector<4x1xf32>
    %63 = arith.mulf %51, %62 : vector<4x1xf32>
    %64 = arith.subf %11, %63 : vector<4x1xf32>
    %65 = vector.broadcast %62 : vector<4x1xf32> to vector<4x128xf32>
    %66 = arith.mulf %45, %65 : vector<4x128xf32>
    %67 = vector.broadcast %64 : vector<4x1xf32> to vector<4x128xf32>
    %68 = arith.addf %66, %67 : vector<4x128xf32>
    %cst_18 = arith.constant 0.000000e+00 : f32
    %69 = vector.broadcast %cst_18 : f32 to vector<4x128xf32>
    %70 = arith.maximumf %68, %69 : vector<4x128xf32>
    %71 = vector.broadcast %16 : vector<1x128xf32> to vector<4x128xf32>
    %72 = arith.mulf %70, %71 : vector<4x128xf32>
    %cst_19 = arith.constant 0.000000e+00 : f32
    %73 = vector.broadcast %cst_19 : f32 to vector<4x1xf32>
    %cst_20 = arith.constant 0.000000e+00 : f32
    %74 = vector.broadcast %cst_20 : f32 to vector<4x3xf32>
    %75 = tpu.concatenate %73, %72, %74 in 1 : vector<4x1xf32>, vector<4x128xf32>, vector<4x3xf32> -> vector<4x132xf32>
    %76 = vector.extract_strided_slice %75 {offsets = [0, 0], sizes = [4, 128], strides = [1, 1]} : vector<4x132xf32> to vector<4x128xf32>
    %77 = vector.extract_strided_slice %75 {offsets = [0, 1], sizes = [4, 128], strides = [1, 1]} : vector<4x132xf32> to vector<4x128xf32>
    %78 = vector.extract_strided_slice %75 {offsets = [0, 2], sizes = [4, 128], strides = [1, 1]} : vector<4x132xf32> to vector<4x128xf32>
    %79 = vector.extract_strided_slice %75 {offsets = [0, 3], sizes = [4, 128], strides = [1, 1]} : vector<4x132xf32> to vector<4x128xf32>
    %80 = tpu.concatenate %76, %77, %78, %79 in 0 : vector<4x128xf32>, vector<4x128xf32>, vector<4x128xf32>, vector<4x128xf32> -> vector<16x128xf32>
    %cst_21 = arith.constant dense<0.000000e+00> : vector<8x128xf32>
    %81 = tpu.matmul %1, %80, %cst_21 {dimension_numbers = #tpu.dot_dimension_numbers<[1], [0], [0], [1], [0, 0, 1, 1], [], []>} : vector<8x16xf32>, vector<16x128xf32>, vector<8x128xf32> -> vector<8x128xf32>
    %82 = vector.broadcast %17 : vector<1x128xf32> to vector<8x128xf32>
    %83 = arith.mulf %81, %82 : vector<8x128xf32>
    %cst_22 = arith.constant dense<0.000000e+00> : vector<8xf32>
    %84 = vector.multi_reduction <add>, %83, %cst_22 [1] : vector<8x128xf32> to vector<8xf32>
    %85 = vector.shape_cast %84 : vector<8xf32> to vector<8x1xf32>
    %cst_23 = arith.constant 0.0357142873 : f32
    %86 = vector.broadcast %cst_23 : f32 to vector<8x1xf32>
    %87 = arith.mulf %85, %86 : vector<8x1xf32>
    %88 = arith.mulf %83, %83 : vector<8x128xf32>
    %cst_24 = arith.constant dense<0.000000e+00> : vector<8xf32>
    %89 = vector.multi_reduction <add>, %88, %cst_24 [1] : vector<8x128xf32> to vector<8xf32>
    %90 = vector.shape_cast %89 : vector<8xf32> to vector<8x1xf32>
    %cst_25 = arith.constant 0.0357142873 : f32
    %91 = vector.broadcast %cst_25 : f32 to vector<8x1xf32>
    %92 = arith.mulf %90, %91 : vector<8x1xf32>
    %93 = arith.mulf %87, %87 : vector<8x1xf32>
    %94 = arith.subf %92, %93 : vector<8x1xf32>
    %cst_26 = arith.constant 9.99999974E-6 : f32
    %95 = vector.broadcast %cst_26 : f32 to vector<8x1xf32>
    %96 = arith.addf %94, %95 : vector<8x1xf32>
    %97 = math.rsqrt %96 : vector<8x1xf32>
    %98 = arith.mulf %97, %12 : vector<8x1xf32>
    %99 = arith.mulf %87, %98 : vector<8x1xf32>
    %100 = arith.subf %13, %99 : vector<8x1xf32>
    %101 = vector.broadcast %98 : vector<8x1xf32> to vector<8x128xf32>
    %102 = arith.mulf %81, %101 : vector<8x128xf32>
    %103 = vector.broadcast %100 : vector<8x1xf32> to vector<8x128xf32>
    %104 = arith.addf %102, %103 : vector<8x128xf32>
    %cst_27 = arith.constant 0.000000e+00 : f32
    %105 = vector.broadcast %cst_27 : f32 to vector<8x128xf32>
    %106 = arith.maximumf %104, %105 : vector<8x128xf32>
    %107 = vector.broadcast %17 : vector<1x128xf32> to vector<8x128xf32>
    %108 = arith.mulf %106, %107 : vector<8x128xf32>
    %cst_28 = arith.constant 0.000000e+00 : f32
    %109 = vector.broadcast %cst_28 : f32 to vector<8x1xf32>
    %cst_29 = arith.constant 0.000000e+00 : f32
    %110 = vector.broadcast %cst_29 : f32 to vector<8x3xf32>
    %111 = tpu.concatenate %109, %108, %110 in 1 : vector<8x1xf32>, vector<8x128xf32>, vector<8x3xf32> -> vector<8x132xf32>
    %112 = vector.extract_strided_slice %111 {offsets = [0, 0], sizes = [8, 128], strides = [1, 1]} : vector<8x132xf32> to vector<8x128xf32>
    %113 = vector.extract_strided_slice %111 {offsets = [0, 1], sizes = [8, 128], strides = [1, 1]} : vector<8x132xf32> to vector<8x128xf32>
    %114 = vector.extract_strided_slice %111 {offsets = [0, 2], sizes = [8, 128], strides = [1, 1]} : vector<8x132xf32> to vector<8x128xf32>
    %115 = vector.extract_strided_slice %111 {offsets = [0, 3], sizes = [8, 128], strides = [1, 1]} : vector<8x132xf32> to vector<8x128xf32>
    %116 = tpu.concatenate %112, %113, %114, %115 in 0 : vector<8x128xf32>, vector<8x128xf32>, vector<8x128xf32>, vector<8x128xf32> -> vector<32x128xf32>
    %cst_30 = arith.constant dense<0.000000e+00> : vector<16x128xf32>
    %117 = tpu.matmul %2, %116, %cst_30 {dimension_numbers = #tpu.dot_dimension_numbers<[1], [0], [0], [1], [0, 0, 1, 1], [], []>} : vector<16x32xf32>, vector<32x128xf32>, vector<16x128xf32> -> vector<16x128xf32>
    %118 = vector.broadcast %18 : vector<1x128xf32> to vector<16x128xf32>
    %119 = arith.mulf %117, %118 : vector<16x128xf32>
    %cst_31 = arith.constant dense<0.000000e+00> : vector<16xf32>
    %120 = vector.multi_reduction <add>, %119, %cst_31 [1] : vector<16x128xf32> to vector<16xf32>
    %121 = vector.shape_cast %120 : vector<16xf32> to vector<16x1xf32>
    %cst_32 = arith.constant 0.0384615399 : f32
    %122 = vector.broadcast %cst_32 : f32 to vector<16x1xf32>
    %123 = arith.mulf %121, %122 : vector<16x1xf32>
    %124 = arith.mulf %119, %119 : vector<16x128xf32>
    %cst_33 = arith.constant dense<0.000000e+00> : vector<16xf32>
    %125 = vector.multi_reduction <add>, %124, %cst_33 [1] : vector<16x128xf32> to vector<16xf32>
    %126 = vector.shape_cast %125 : vector<16xf32> to vector<16x1xf32>
    %cst_34 = arith.constant 0.0384615399 : f32
    %127 = vector.broadcast %cst_34 : f32 to vector<16x1xf32>
    %128 = arith.mulf %126, %127 : vector<16x1xf32>
    %129 = arith.mulf %123, %123 : vector<16x1xf32>
    %130 = arith.subf %128, %129 : vector<16x1xf32>
    %cst_35 = arith.constant 9.99999974E-6 : f32
    %131 = vector.broadcast %cst_35 : f32 to vector<16x1xf32>
    %132 = arith.addf %130, %131 : vector<16x1xf32>
    %133 = math.rsqrt %132 : vector<16x1xf32>
    %134 = arith.mulf %133, %14 : vector<16x1xf32>
    %135 = arith.mulf %123, %134 : vector<16x1xf32>
    %136 = arith.subf %15, %135 : vector<16x1xf32>
    %137 = vector.broadcast %134 : vector<16x1xf32> to vector<16x128xf32>
    %138 = arith.mulf %117, %137 : vector<16x128xf32>
    %139 = vector.broadcast %136 : vector<16x1xf32> to vector<16x128xf32>
    %140 = arith.addf %138, %139 : vector<16x128xf32>
    %cst_36 = arith.constant 0.000000e+00 : f32
    %141 = vector.broadcast %cst_36 : f32 to vector<16x128xf32>
    %142 = arith.maximumf %140, %141 : vector<16x128xf32>
    %143 = vector.broadcast %18 : vector<1x128xf32> to vector<16x128xf32>
    %144 = arith.mulf %142, %143 : vector<16x128xf32>
    %cst_37 = arith.constant dense<0.000000e+00> : vector<16x128xf32>
    %145 = tpu.matmul %144, %9, %cst_37 {dimension_numbers = #tpu.dot_dimension_numbers<[1], [0], [0], [1], [0, 0, 1, 1], [], []>} : vector<16x128xf32>, vector<128x128xf32>, vector<16x128xf32> -> vector<16x128xf32>
    %cst_38 = arith.constant 0.000000e+00 : f32
    %146 = vector.broadcast %cst_38 : f32 to vector<16x1xf32>
    %cst_39 = arith.constant 0.000000e+00 : f32
    %147 = vector.broadcast %cst_39 : f32 to vector<16x3xf32>
    %148 = tpu.concatenate %146, %145, %147 in 1 : vector<16x1xf32>, vector<16x128xf32>, vector<16x3xf32> -> vector<16x132xf32>
    %149 = vector.extract_strided_slice %148 {offsets = [0, 0], sizes = [16, 128], strides = [1, 1]} : vector<16x132xf32> to vector<16x128xf32>
    %150 = vector.extract_strided_slice %148 {offsets = [0, 1], sizes = [16, 128], strides = [1, 1]} : vector<16x132xf32> to vector<16x128xf32>
    %151 = vector.extract_strided_slice %148 {offsets = [0, 2], sizes = [16, 128], strides = [1, 1]} : vector<16x132xf32> to vector<16x128xf32>
    %152 = tpu.concatenate %149, %150, %151 in 0 : vector<16x128xf32>, vector<16x128xf32>, vector<16x128xf32> -> vector<48x128xf32>
    %cst_40 = arith.constant dense<0.000000e+00> : vector<1x128xf32>
    %153 = tpu.matmul %3, %152, %cst_40 {dimension_numbers = #tpu.dot_dimension_numbers<[1], [0], [0], [1], [0, 0, 1, 1], [], []>} : vector<1x48xf32>, vector<48x128xf32>, vector<1x128xf32> -> vector<1x128xf32>
    %154 = vector.broadcast %4 : vector<1x1xf32> to vector<1x128xf32>
    %155 = arith.addf %153, %154 : vector<1x128xf32>
    %c0_41 = arith.constant 0 : index
    %c0_42 = arith.constant 0 : index
    %156 = vector.load %arg2[%c0_41, %c0_42] : memref<1x128xf32, #tpu.memory_space<vmem>>, vector<1x128xf32>
    tpu.vector_store %arg2[%c0_41, %c0_42], %155 {strides = array<i32>} : memref<1x128xf32, #tpu.memory_space<vmem>>, vector<1x128xf32>,
    return
  }
}

</mosaic_0001>

<llo_original>
// kernel: squeeze.3
$region0: #{squeeze.3}
  %s0 = inlined_call_operand.vmem [shape: f32[64], index: 0, kind: input, shape index: {}]
  %s1 = inlined_call_operand.hbm [shape: f32[2,32], index: 1, kind: output, shape index: {}]
  $region1: #{squeeze.3} parent=0
    #allocation0 [shape = 'u8[1024]{0}', space=vmem, size = 0x400, scoped, tag = 'operand span for operand 1']
    #allocation1 [shape = 's32[1]{0}', space=sflag, size = 0x4, scoped, tag = 'scoped memory for squeeze.3']
    #allocation2 [shape = 'u8[4096]{0}', space=vmem, size = 0x1000, scoped, tag = 'scoped mem for output reshape']
    #allocation3 [shape = 'u8[4096]{0}', space=vmem, size = 0x1000, scoped, tag = 'scoped mem for input reshape']
    %2 = vsyncpa [#allocation1], 0
    %s4 = ssub.s32 2, 1
    %v5 = vld [vmem:[%s0] sm:%s4]
    %6 = vst [vmem:[#allocation3] sm:%s4] %v5
    %v7 = vld [vmem:[#allocation3] sm:$0x1]
    %vm8 = vcmask 261120
    %9 = vst.msk [vmem:[#allocation2] sm:$0x1] %vm8, %v7
    %v10 = vld [vmem:[#allocation3] sm:$0x1]
    %11 = vrot.lane.b32.xlu0 %v10, 96
    %v12 = vpop.permute.xlu0 %11
    %vm13 = vcmask 261120
    %s14 = scalar_lea.vmem [#allocation2], 1
    %15 = vst.msk [vmem:[%s14] sm:$0x1] %vm13, %v12
    %s17 = ssub.s32 4, 1
    %v18 = vld [vmem:[#allocation2] sm:%s17]
    %s20 = ssub.s32 4, 1
    %21 = vst [vmem:[#allocation0] sm:%s20] %v18
    %23 = vsyncadd [#allocation1], 0
    %s25 = sshll.u32 [#allocation0], 4
    %s26 = int_to_ptr.vmem [resolvable:$true] %s25
    %s27 = sshll.u32 %s1, 4
    %s28 = int_to_ptr.hbm [resolvable:$true] %s27
    %30 = dma.vmem_to_hbm [thread:$0]  %s26, 32, %s28, [#allocation1]
    %32 = dma.done [#allocation1], 32
    %33 = vsyncpa [#allocation1], 1

// kernel: picnn_forward.1
$region0: #{picnn_forward.1}
  #allocation0 [shape = 'u32[]', space=smem, size = 0x4, offset = 0x4, fixed_abs, tag = 'smem constant byte address 0x4 - core index']
  #allocation1 [shape = 'u32[72,128]{1,0:T(1,128)}', space=vmem, size = 0x9000, scoped, tag = 'internal scratch']
  %s0 = inlined_call_operand.vmem [shape: f32[1,128], index: 0, kind: input, shape index: {}]
  %s1 = inlined_call_operand.hbm [shape: f32[232,128], index: 1, kind: input, shape index: {}]
  %s2 = inlined_call_operand.vmem [shape: f32[1,128], index: 2, kind: output, shape index: {}]
  %s3 = sld [smem:[#allocation0]]
  $region22: #{picnn_forward.1} parent=0
    _
  %s5 = ssub.s32 1, %s3
  %s6 = scalar_select 0, %s5, %s3
  $region1: #{picnn_forward.1} parent=0
    #allocation2 [shape = 'u8[118784]{0}', space=vmem, size = 0x1d000, scoped, tag = 'input window, operand 1, single buffered']
    #allocation3 [shape = 's32[1]{0}', space=sflag, size = 0x4, scoped, tag = 'scoped memory for picnn_forward.1']
    %7 = vsyncpa [#allocation3], 0
    // Predicated region
    $region2: #{picnn_forward.1} parent=1 // pred_check
      _
    $region3: #{picnn_forward.1} parent=1 // pred_check_branch
      %9 = sbr.rel (0) target = $region5
    $region4: #{picnn_forward.1} parent=1 // pred_region
      _
    $region5: #{picnn_forward.1} parent=1 // pred_fallthru
      _
    // Predicated region
    $region6: #{picnn_forward.1} parent=1 // pred_check
      _
    $region7: #{picnn_forward.1} parent=1 // pred_check_branch
      %11 = sbr.rel (0) target = $region9
    $region8: #{picnn_forward.1} parent=1 // pred_region
      %13 = vsyncadd [#allocation3], 0
      %s14 = sshll.u32 %s1, 4
      %s15 = int_to_ptr.hbm [resolvable:$true] %s14
      %s16 = sshll.u32 [#allocation2], 4
      %s17 = int_to_ptr.vmem [resolvable:$true] %s16
      %22 = dma.hbm_to_vmem [thread:$0]  %s15, 3712, %s17, [#allocation3], 128, 128, 8
    $region9: #{picnn_forward.1} parent=1 // pred_fallthru
      _
    // Predicated region
    $region10: #{picnn_forward.1} parent=1 // pred_check
      _
    $region11: #{picnn_forward.1} parent=1 // pred_check_branch
      %24 = sbr.rel (0) target = $region13
    $region12: #{picnn_forward.1} parent=1 // pred_region
      %26 = dma.done [#allocation3], 3712
    $region13: #{picnn_forward.1} parent=1 // pred_fallthru
      _
    %v27 = vld [vmem:[#allocation2] sm:$0xf]
    %v28 = vld [vmem:[#allocation2 + $0x8] sm:$0xff]
    %v29 = vld [vmem:[#allocation2 + $0x10] sm:$0xff]
    %v30 = vld [vmem:[#allocation2 + $0x18] sm:$0xff]
    %v31 = vld [vmem:[#allocation2 + $0x20] sm:$0x1]
    %v32 = vld [vmem:[#allocation2 + $0x21] sm:$0x1]
    %v33 = vld [vmem:[#allocation2 + $0x28] sm:$0xff]
    %v34 = vld [vmem:[#allocation2 + $0x30] sm:$0xff]
    %v35 = vld [vmem:[#allocation2 + $0x38] sm:$0xff]
    %v36 = vld [vmem:[#allocation2 + $0x40] sm:$0xff]
    %v37 = vld [vmem:[#allocation2 + $0x48] sm:$0xff]
    %v38 = vld [vmem:[#allocation2 + $0x50] sm:$0xff]
    %v39 = vld [vmem:[#allocation2 + $0x58] sm:$0xff]
    %v40 = vld [vmem:[#allocation2 + $0x60] sm:$0x7]
    %v41 = vld [vmem:[#allocation2 + $0x68] sm:$0xff]
    %v42 = vld [vmem:[#allocation2 + $0x70] sm:$0xff]
    %v43 = vld [vmem:[#allocation2 + $0x78] sm:$0xff]
    %v44 = vld [vmem:[#allocation2 + $0x80] sm:$0xff]
    %v45 = vld [vmem:[#allocation2 + $0x88] sm:$0xff]
    %v46 = vld [vmem:[#allocation2 + $0x90] sm:$0xff]
    %v47 = vld [vmem:[#allocation2 + $0x98] sm:$0xff]
    %v48 = vld [vmem:[#allocation2 + $0xa0] sm:$0xff]
    %v49 = vld [vmem:[#allocation2 + $0xa8] sm:$0xff]
    %v50 = vld [vmem:[#allocation2 + $0xb0] sm:$0xff]
    %v51 = vld [vmem:[#allocation2 + $0xb8] sm:$0xff]
    %v52 = vld [vmem:[#allocation2 + $0xc0] sm:$0xff]
    %v53 = vld [vmem:[#allocation2 + $0xc8] sm:$0xff]
    %v54 = vld [vmem:[#allocation2 + $0xd0] sm:$0xff]
    %v55 = vld [vmem:[#allocation2 + $0xd8] sm:$0xff]
    %v56 = vld [vmem:[#allocation2 + $0xe0] sm:$0xff]
    %v57 = vld [vmem:[%s0] sm:$0x1]
    %v59 = vperm.slane %v57, 0
    %60 = vrot.lane.b32.xlu0 %v59, 1
    %v61 = vpop.permute.xlu0 %60
    %vm63 = vcmask 7168
    %v64 = vsel %vm63, 0.0, %v61
    %v65 = vsel %vm63, %v61, 0.0
    %67 = vset.pattern.permute.xlu0 0
    %68 = vperm.xlu0 %67, %v27
    %v69 = vpop.permute.xlu0 %68
    %v71 = vperm.slane %v64, 0
    %v72 = vmul.f32 %v69, %v71
    %73 = vset.pattern.permute.xlu0 1
    %74 = vperm.xlu0 %73, %v27
    %v75 = vpop.permute.xlu0 %74
    %v77 = vperm.slane %v65, 0
    %v78 = vmul.f32 %v75, %v71
    %v79 = vmul.f32 %v75, %v77
    %82 = vrot.lane.b32.xlu0 %v78, 127
    %v83 = vpop.permute.xlu0 %82
    %84 = vrot.lane.b32.xlu0 %v79, 127
    %v85 = vpop.permute.xlu0 %84
    %vm86 = vcmask 1039360
    %v87 = vsel %vm86, %v83, %v85
    %v89 = vadd.f32 %v72, %v87
    %90 = vset.pattern.permute.xlu0 2
    %91 = vperm.xlu0 %90, %v27
    %v92 = vpop.permute.xlu0 %91
    %v94 = vmul.f32 %v92, %v71
    %v95 = vmul.f32 %v92, %v77
    %98 = vrot.lane.b32.xlu0 %v94, 126
    %v99 = vpop.permute.xlu0 %98
    %100 = vrot.lane.b32.xlu0 %v95, 126
    %v101 = vpop.permute.xlu0 %100
    %vm102 = vcmask 1031168
    %v103 = vsel %vm102, %v99, %v101
    %v105 = vadd.f32 %v89, %v103
    %106 = vset.pattern.permute.xlu0 3
    %107 = vperm.xlu0 %106, %v27
    %v108 = vpop.permute.xlu0 %107
    %v110 = vmul.f32 %v108, %v71
    %v111 = vmul.f32 %v108, %v77
    %114 = vrot.lane.b32.xlu0 %v110, 125
    %v115 = vpop.permute.xlu0 %114
    %116 = vrot.lane.b32.xlu0 %v111, 125
    %v117 = vpop.permute.xlu0 %116
    %vm118 = vcmask 1022976
    %v119 = vsel %vm118, %v115, %v117
    %v121 = vadd.f32 %v105, %v119
    %v122 = vperm.slane %v40, 0
    %v123 = vmul.f32 %v121, %v122
    %vm124 = vcmask 1043456
    %v125 = vsel %vm124, %v123, 0.0
    %126 = vadd.xlane.f32.xlu0 %v125
    %v127 = vpop.xlane.xlu0 %126
    %v128 = vmul.f32 %v127, 0.033333335
    %v129 = vmul.f32 %v123, %v123
    %v130 = vsel %vm124, %v129, 0.0
    %131 = vadd.xlane.f32.xlu0 %v130
    %v132 = vpop.xlane.xlu0 %131
    %v133 = vmul.f32 %v132, 0.033333335
    %v134 = vmul.f32 %v128, %v128
    %v135 = vsub.f32 %v133, %v134
    %v136 = vadd.f32 %v135, 1e-05
    %v137 = vrsqrt.pop %v136
    %v138 = vmul.f32 %v137, %v136
    %v139 = vmul.f32 %v138, %v137
    %v140 = vmul.f32 0.5, %v139
    %v141 = vsub.f32 1.5, %v140
    %v142 = vmul.f32 %v137, %v141
    %vm143 = vweird.f32 %v136
    %vm144 = vweird.f32 %v137
    %vm145 = vmor %vm143, %vm144
    %v146 = vsel %vm145, %v137, %v142
    %v147 = vmul.f32 %v146, %v33
    %v148 = vmul.f32 %v128, %v147
    %v150 = vrot.slane %v148, 4
    %v152 = vsub.f32 %v33, %v150
    %154 = vset.pattern.permute.xlu0 0
    %155 = vperm.xlu0 %154, %v147
    %v156 = vpop.permute.xlu0 %155
    %v158 = vmul.f32 %v121, %v156
    %160 = vset.pattern.permute.xlu0 0
    %161 = vperm.xlu0 %160, %v152
    %v162 = vpop.permute.xlu0 %161
    %v163 = vrot.slane %v162, 4
    %v165 = vadd.f32 %v158, %v163
    %v166 = vmax.f32 %v165, 0.0
    %v167 = vmul.f32 %v166, %v122
    %169 = vrot.lane.b32.xlu0 %v167, 1
    %v170 = vpop.permute.xlu0 %169
    %v172 = vsel %vm63, 0.0, %v170
    %v173 = vsel %vm63, %v170, 0.0
    %v176 = vrot.slane %v172, 4
    %v177 = vrot.slane %v173, 4
    %178 = vrot.lane.b32.xlu0 %v176, 127
    %v179 = vpop.permute.xlu0 %178
    %180 = vrot.lane.b32.xlu0 %v177, 127
    %v181 = vpop.permute.xlu0 %180
    %v182 = vsel %vm86, %v179, %v181
    %184 = vrot.lane.b32.xlu0 %v172, 126
    %v185 = vpop.permute.xlu0 %184
    %186 = vrot.lane.b32.xlu0 %v173, 126
    %v187 = vpop.permute.xlu0 %186
    %v188 = vsel %vm102, %v185, %v187
    %190 = vrot.lane.b32.xlu0 %v176, 125
    %v191 = vpop.permute.xlu0 %190
    %192 = vrot.lane.b32.xlu0 %v177, 125
    %v193 = vpop.permute.xlu0 %192
    %v194 = vsel %vm118, %v191, %v193
    %v196 = vsel %vm124, %v172, %v182
    %v197 = vsel %vm124, %v188, %v194
    %vm198 = vcmask 130048
    %v200 = vsel %vm198, %v28, 0
    %202 = vmatpush.msra.mxu0 0.0
    %203 = vmatpush.msra.mxu0 0.0
    %204 = vmatpush.msra.mxu0 0.0
    %205 = vmatpush.msra.mxu0 0.0
    %206 = vmatpush.msra.mxu0 0.0
    %207 = vmatpush.msra.mxu0 0.0
    %208 = vmatpush.msra.mxu0 0.0
    %209 = vmatpush.msra.mxu0 0.0
    %210 = vmatpush.msra.mxu0 0.0
    %211 = vmatpush.msra.mxu0 0.0
    %212 = vmatpush.msra.mxu0 0.0
    %213 = vmatpush.msra.mxu0 0.0
    %214 = vmatpush.msra.mxu0 0.0
    %215 = vmatpush.msra.mxu0 0.0
    %216 = vmatpush.msra.mxu0 %v197
    %217 = vmatpush.msra.mxu0 %v196
    %218 = vmatmul.f32.gmra.mxu0 %v200
    %v219 = vpop.f32.mrf.mxu0
    %v220 = vadd.f32 0.0, %v219
    %221 = vdwg.mxu0
    %v222 = vperm.slane %v40, 1
    %v223 = vmul.f32 %v220, %v222
    %224 = vadd.xlane.f32.xlu0 %v223
    %v225 = vpop.xlane.xlu0 %224
    %v226 = vmul.f32 %v225, 0.035714287
    %v227 = vmul.f32 %v223, %v223
    %228 = vadd.xlane.f32.xlu0 %v227
    %v229 = vpop.xlane.xlu0 %228
    %v230 = vmul.f32 %v229, 0.035714287
    %v231 = vmul.f32 %v226, %v226
    %v232 = vsub.f32 %v230, %v231
    %v233 = vadd.f32 %v232, 1e-05
    %v234 = vrsqrt.pop %v233
    %v235 = vmul.f32 %v234, %v233
    %v236 = vmul.f32 %v235, %v234
    %v237 = vmul.f32 0.5, %v236
    %v238 = vsub.f32 1.5, %v237
    %v239 = vmul.f32 %v234, %v238
    %vm240 = vweird.f32 %v233
    %vm241 = vweird.f32 %v234
    %vm242 = vmor %vm240, %vm241
    %v243 = vsel %vm242, %v234, %v239
    %v244 = vmul.f32 %v243, %v34
    %v245 = vmul.f32 %v226, %v244
    %v246 = vsub.f32 %v35, %v245
    %248 = vset.pattern.permute.xlu0 0
    %249 = vperm.xlu0 %248, %v244
    %v250 = vpop.permute.xlu0 %249
    %v252 = vmul.f32 %v220, %v250
    %254 = vset.pattern.permute.xlu0 0
    %255 = vperm.xlu0 %254, %v246
    %v256 = vpop.permute.xlu0 %255
    %v258 = vadd.f32 %v252, %v256
    %v259 = vmax.f32 %v258, 0.0
    %v260 = vmul.f32 %v259, %v222
    %262 = vrot.lane.b32.xlu0 %v260, 1
    %v263 = vpop.permute.xlu0 %262
    %v265 = vsel %vm63, 0.0, %v263
    %v266 = vsel %vm63, %v263, 0.0
    %269 = vrot.lane.b32.xlu0 %v265, 127
    %v270 = vpop.permute.xlu0 %269
    %271 = vrot.lane.b32.xlu0 %v266, 127
    %v272 = vpop.permute.xlu0 %271
    %v273 = vsel %vm86, %v270, %v272
    %275 = vrot.lane.b32.xlu0 %v265, 126
    %v276 = vpop.permute.xlu0 %275
    %277 = vrot.lane.b32.xlu0 %v266, 126
    %v278 = vpop.permute.xlu0 %277
    %v279 = vsel %vm102, %v276, %v278
    %281 = vrot.lane.b32.xlu0 %v265, 125
    %v282 = vpop.permute.xlu0 %281
    %283 = vrot.lane.b32.xlu0 %v266, 125
    %v284 = vpop.permute.xlu0 %283
    %v285 = vsel %vm118, %v282, %v284
    %vm287 = vcmask 261120
    %v289 = vsel %vm287, %v29, 0
    %v292 = vsel %vm287, %v30, 0
    %294 = vmatpush.msra.mxu0 0.0
    %295 = vmatpush.msra.mxu0 0.0
    %296 = vmatpush.msra.mxu0 0.0
    %297 = vmatpush.msra.mxu0 0.0
    %298 = vmatpush.msra.mxu0 0.0
    %299 = vmatpush.msra.mxu0 0.0
    %300 = vmatpush.msra.mxu0 0.0
    %301 = vmatpush.msra.mxu0 0.0
    %302 = vmatpush.msra.mxu0 0.0
    %303 = vmatpush.msra.mxu0 0.0
    %304 = vmatpush.msra.mxu0 0.0
    %305 = vmatpush.msra.mxu0 0.0
    %306 = vmatpush.msra.mxu0 %v285
    %307 = vmatpush.msra.mxu0 %v279
    %308 = vmatpush.msra.mxu0 %v273
    %309 = vmatpush.msra.mxu0 %v265
    %310 = vmatmul.f32.gmra.mxu0 %v289
    %v311 = vpop.f32.mrf.mxu0
    %v312 = vadd.f32 0.0, %v311
    %313 = vmatmul.f32.gmra.mxu0 %v292
    %v314 = vpop.f32.mrf.mxu0
    %v315 = vadd.f32 0.0, %v314
    %316 = vdwg.mxu0
    %v317 = vperm.slane %v40, 2
    %v318 = vmul.f32 %v312, %v317
    %v319 = vmul.f32 %v315, %v317
    %320 = vadd.xlane.f32.xlu0 %v318
    %v321 = vpop.xlane.xlu0 %320
    %322 = vadd.xlane.f32.xlu0 %v319
    %v323 = vpop.xlane.xlu0 %322
    %v324 = vmul.f32 %v321, 0.03846154
    %v325 = vmul.f32 %v323, 0.03846154
    %v326 = vmul.f32 %v318, %v318
    %v327 = vmul.f32 %v319, %v319
    %328 = vadd.xlane.f32.xlu0 %v326
    %v329 = vpop.xlane.xlu0 %328
    %330 = vadd.xlane.f32.xlu0 %v327
    %v331 = vpop.xlane.xlu0 %330
    %v332 = vmul.f32 %v329, 0.03846154
    %v333 = vmul.f32 %v331, 0.03846154
    %v334 = vmul.f32 %v324, %v324
    %v335 = vmul.f32 %v325, %v325
    %v336 = vsub.f32 %v332, %v334
    %v337 = vsub.f32 %v333, %v335
    %v338 = vadd.f32 %v336, 1e-05
    %v339 = vadd.f32 %v337, 1e-05
    %v340 = vrsqrt.pop %v338
    %v341 = vmul.f32 %v340, %v338
    %v342 = vmul.f32 %v341, %v340
    %v343 = vmul.f32 0.5, %v342
    %v344 = vsub.f32 1.5, %v343
    %v345 = vmul.f32 %v340, %v344
    %vm346 = vweird.f32 %v338
    %vm347 = vweird.f32 %v340
    %vm348 = vmor %vm346, %vm347
    %v349 = vsel %vm348, %v340, %v345
    %v350 = vrsqrt.pop %v339
    %v351 = vmul.f32 %v350, %v339
    %v352 = vmul.f32 %v351, %v350
    %v353 = vmul.f32 0.5, %v352
    %v354 = vsub.f32 1.5, %v353
    %v355 = vmul.f32 %v350, %v354
    %vm356 = vweird.f32 %v339
    %vm357 = vweird.f32 %v350
    %vm358 = vmor %vm356, %vm357
    %v359 = vsel %vm358, %v350, %v355
    %v360 = vmul.f32 %v349, %v36
    %v361 = vmul.f32 %v359, %v37
    %v362 = vmul.f32 %v324, %v360
    %v363 = vmul.f32 %v325, %v361
    %v364 = vsub.f32 %v38, %v362
    %v365 = vsub.f32 %v39, %v363
    %367 = vset.pattern.permute.xlu0 0
    %368 = vperm.xlu0 %367, %v360
    %v369 = vpop.permute.xlu0 %368
    %372 = vset.pattern.permute.xlu0 0
    %373 = vperm.xlu0 %372, %v361
    %v374 = vpop.permute.xlu0 %373
    %v376 = vmul.f32 %v312, %v369
    %v377 = vmul.f32 %v315, %v374
    %379 = vset.pattern.permute.xlu0 0
    %380 = vperm.xlu0 %379, %v364
    %v381 = vpop.permute.xlu0 %380
    %384 = vset.pattern.permute.xlu0 0
    %385 = vperm.xlu0 %384, %v365
    %v386 = vpop.permute.xlu0 %385
    %v388 = vadd.f32 %v376, %v381
    %v389 = vadd.f32 %v377, %v386
    %v390 = vmax.f32 %v388, 0.0
    %v391 = vmax.f32 %v389, 0.0
    %v392 = vmul.f32 %v390, %v317
    %v393 = vmul.f32 %v391, %v317
    %394 = vmatpush.msra.mxu0 %v56
    %395 = vmatpush.msra.mxu0 %v55
    %396 = vmatpush.msra.mxu0 %v54
    %397 = vmatpush.msra.mxu0 %v53
    %398 = vmatpush.msra.mxu0 %v52
    %399 = vmatpush.msra.mxu0 %v51
    %400 = vmatpush.msra.mxu0 %v50
    %401 = vmatpush.msra.mxu0 %v49
    %402 = vmatpush.msra.mxu0 %v48
    %403 = vmatpush.msra.mxu0 %v47
    %404 = vmatpush.msra.mxu0 %v46
    %405 = vmatpush.msra.mxu0 %v45
    %406 = vmatpush.msra.mxu0 %v44
    %407 = vmatpush.msra.mxu0 %v43
    %408 = vmatpush.msra.mxu0 %v42
    %409 = vmatpush.msra.mxu0 %v41
    %410 = vmatmul.f32.gmra.mxu0 %v392
    %v411 = vpop.f32.mrf.mxu0
    %v412 = vadd.f32 0.0, %v411
    %413 = vmatmul.f32.gmra.mxu0 %v393
    %v414 = vpop.f32.mrf.mxu0
    %v415 = vadd.f32 0.0, %v414
    %416 = vdwg.mxu0
    %419 = vrot.lane.b32.xlu0 %v412, 1
    %v420 = vpop.permute.xlu0 %419
    %421 = vrot.lane.b32.xlu0 %v415, 1
    %v422 = vpop.permute.xlu0 %421
    %v425 = vsel %vm63, 0.0, %v420
    %v426 = vsel %vm63, 0.0, %v422
    %v427 = vsel %vm63, %v420, 0.0
    %v428 = vsel %vm63, %v422, 0.0
    %433 = vrot.lane.b32.xlu0 %v425, 127
    %v434 = vpop.permute.xlu0 %433
    %435 = vrot.lane.b32.xlu0 %v427, 127
    %v436 = vpop.permute.xlu0 %435
    %437 = vrot.lane.b32.xlu0 %v426, 127
    %v438 = vpop.permute.xlu0 %437
    %439 = vrot.lane.b32.xlu0 %v428, 127
    %v440 = vpop.permute.xlu0 %439
    %v441 = vsel %vm86, %v434, %v436
    %v442 = vsel %vm86, %v438, %v440
    %445 = vrot.lane.b32.xlu0 %v425, 126
    %v446 = vpop.permute.xlu0 %445
    %447 = vrot.lane.b32.xlu0 %v427, 126
    %v448 = vpop.permute.xlu0 %447
    %449 = vrot.lane.b32.xlu0 %v426, 126
    %v450 = vpop.permute.xlu0 %449
    %451 = vrot.lane.b32.xlu0 %v428, 126
    %v452 = vpop.permute.xlu0 %451
    %v453 = vsel %vm102, %v446, %v448
    %v454 = vsel %vm102, %v450, %v452
    %458 = vset.pattern.permute.xlu0 0
    %459 = vperm.xlu0 %458, %v32
    %v460 = vpop.permute.xlu0 %459
    %vm462 = vcmask 392192
    %v464 = vsel %vm462, %v31, 0
    %466 = vmatpush.msra.mxu0 0.0
    %467 = vmatpush.msra.mxu0 0.0
    %468 = vmatpush.msra.mxu0 0.0
    %469 = vmatpush.msra.mxu0 0.0
    %470 = vmatpush.msra.mxu0 0.0
    %471 = vmatpush.msra.mxu0 0.0
    %472 = vmatpush.msra.mxu0 0.0
    %473 = vmatpush.msra.mxu0 0.0
    %474 = vmatpush.msra.mxu0 0.0
    %475 = vmatpush.msra.mxu0 0.0
    %476 = vmatpush.msra.mxu0 %v454
    %477 = vmatpush.msra.mxu0 %v453
    %478 = vmatpush.msra.mxu0 %v442
    %479 = vmatpush.msra.mxu0 %v441
    %480 = vmatpush.msra.mxu0 %v426
    %481 = vmatpush.msra.mxu0 %v425
    %482 = vmatmul.f32.gmra.mxu0 %v464
    %v483 = vpop.f32.mrf.mxu0
    %v484 = vadd.f32 %v460, %v483
    %485 = vdwg.mxu0
    %486 = vst [vmem:[%s2] sm:$0x1] %v484
    // Predicated region
    $region14: #{picnn_forward.1} parent=1 // pred_check
      _
    $region15: #{picnn_forward.1} parent=1 // pred_check_branch
      %488 = sbr.rel (0) target = $region17
    $region16: #{picnn_forward.1} parent=1 // pred_region
      _
    $region17: #{picnn_forward.1} parent=1 // pred_fallthru
      _
    // Predicated region
    $region18: #{picnn_forward.1} parent=1 // pred_check
      _
    $region19: #{picnn_forward.1} parent=1 // pred_check_branch
      %490 = sbr.rel (0) target = $region21
    $region20: #{picnn_forward.1} parent=1 // pred_region
      _
    $region21: #{picnn_forward.1} parent=1 // pred_fallthru
      _
    %491 = vsyncpa [#allocation3], 1

</llo_original>
